<compile_context>
chip_gen: v5e
topology: v5e:2x2
jax: 0.10.0
libtpu: 0.0.40
codegen_flags: <defaults>
</compile_context>

<pallas_src>
import functools

import jax
import jax.numpy as jnp
from jax.experimental import pallas as pl
from jax.experimental.pallas import tpu as pltpu


def _round_up(x: int, m: int) -> int:
    return (x + m - 1) // m * m


def _text_encoder_kernel(emb_ref, wc_ref, bc_ref, wa_ref, ba_ref, q_ref, o_ref,
                         *, tb: int, seq_len: int, window: int, pad: int):
    """One tile of TB batch elements per grid step.

    emb_ref: (TB, L, D)        embedded text (unpadded along seq)
    wc_ref : (W*D, F_pad)      conv kernel, im2col layout, lane-padded
    bc_ref : (1, F_pad)        conv bias
    wa_ref : (F_pad, Q_pad)    additive-attention projection weight
    ba_ref : (1, Q_pad)        additive-attention projection bias
    q_ref  : (1, Q_pad)        additive-attention query vector (row)
    o_ref  : (TB, F_pad)       output tile (lane dense)
    """
    TB, L, W = tb, seq_len, window
    D = emb_ref.shape[2]

    emb = emb_ref[...]                                      # (TB, L, D)

    # --- zero-fill the conv halo inside VMEM (no HBM pad pass) ------------
    if pad > 0:
        z = jnp.zeros((TB, pad, D), emb.dtype)
        emb_p = jnp.concatenate([z, emb, z], axis=1)        # (TB, L + 2*pad, D)
    else:
        emb_p = emb

    # --- im2col: one MXU matmul instead of W shifted matmuls --------------
    win = jnp.concatenate([emb_p[:, w:w + L, :] for w in range(W)], axis=-1)
    win2 = win.reshape(TB * L, W * D)                       # (TB*L, W*D)

    c = jnp.dot(win2, wc_ref[...], preferred_element_type=jnp.float32)
    c = jnp.maximum(c + bc_ref[...], 0.0)                   # (TB*L, F_pad)

    # --- additive attention ------------------------------------------------
    a = jnp.tanh(jnp.dot(c, wa_ref[...], preferred_element_type=jnp.float32)
                 + ba_ref[...])                              # (TB*L, Q_pad)
    # score = a . q  as VPU multiply + lane reduce (keeps the MXU free).
    s = jnp.sum(a * q_ref[...], axis=-1, keepdims=True)     # (TB*L, 1)
    # Global shift is softmax-invariant per sequence (same constant per row).
    s = s - jnp.max(s, axis=0, keepdims=True)
    e = jnp.exp(s)                                           # (TB*L, 1)

    # --- per-sequence softmax-weighted sum as a segment-sum matmul --------
    row = jax.lax.broadcasted_iota(jnp.int32, (TB, TB * L), 0)
    col = jax.lax.broadcasted_iota(jnp.int32, (TB, TB * L), 1)
    lo = row * L
    seg = ((col >= lo) & (col < lo + L)).astype(jnp.float32)  # (TB, TB*L) 0/1

    num = jnp.dot(seg, e * c, preferred_element_type=jnp.float32)  # (TB, F_pad)
    den = jnp.dot(seg, e, preferred_element_type=jnp.float32)      # (TB, 1)
    o_ref[...] = (num / den).astype(o_ref.dtype)


def text_encoder_forward(text, embedding_table, conv_w, conv_b,
                         attn_w, attn_b, attn_q, *, window_size: int,
                         batch_tile: int = 8):
    """text: (B, L) int32 token ids.  conv_w: (W, D, F).  Returns (B, F) f32."""
    if window_size % 2 == 0:
        # PyTorch Conv2d with padding (W-1)//2 gives length L-1 for even W.
        raise ValueError("window_size must be odd for same-length convolution")

    B, L = text.shape
    V, D = embedding_table.shape
    W = window_size
    F = conv_w.shape[2]
    Q = attn_w.shape[1]
    pad = (W - 1) // 2

    TB = max(8, _round_up(batch_tile, 8))     # sublane-aligned batch tile
    B_pad = _round_up(B, TB)
    F_pad = _round_up(F, 128)                 # lane-dense output / weights
    Q_pad = _round_up(Q, 128)

    # Embedding lookup (gather) stays in the wrapper.
    # TODO(synk): move the gather in-kernel (scalar-prefetched token ids +
    # manual DMA gather from an HBM-resident table) to halve HBM traffic.
    if B_pad != B:
        text = jnp.pad(text, ((0, B_pad - B), (0, 0)))       # pad with token 0
    emb = jnp.take(embedding_table, text, axis=0).astype(jnp.float32)  # (B_pad, L, D)

    # Lane-dense, zero-padded weight layouts (padded rows/cols contribute 0).
    wc = jnp.zeros((W * D, F_pad), jnp.float32).at[:, :F].set(
        conv_w.reshape(W * D, F).astype(jnp.float32))
    bc = jnp.zeros((1, F_pad), jnp.float32).at[:, :F].set(conv_b.reshape(1, F))
    wa = jnp.zeros((F_pad, Q_pad), jnp.float32).at[:F, :Q].set(
        attn_w.astype(jnp.float32))
    ba = jnp.zeros((1, Q_pad), jnp.float32).at[:, :Q].set(attn_b.reshape(1, Q))
    q = jnp.zeros((1, Q_pad), jnp.float32).at[:, :Q].set(attn_q.reshape(1, Q))

    kernel = functools.partial(_text_encoder_kernel, tb=TB, seq_len=L,
                               window=W, pad=pad)

    out = pl.pallas_call(
        kernel,
        out_shape=jax.ShapeDtypeStruct((B_pad, F_pad), jnp.float32),
        grid_spec=pltpu.PrefetchScalarGridSpec(
            num_scalar_prefetch=0,
            grid=(B_pad // TB,),
            in_specs=[
                pl.BlockSpec((TB, L, D), lambda b: (b, 0, 0)),    # emb tile
                # Constant index maps below: Mosaic fetches the weights once.
                pl.BlockSpec((W * D, F_pad), lambda b: (0, 0)),   # conv W
                pl.BlockSpec((1, F_pad), lambda b: (0, 0)),       # conv b
                pl.BlockSpec((F_pad, Q_pad), lambda b: (0, 0)),   # attn W
                pl.BlockSpec((1, Q_pad), lambda b: (0, 0)),       # attn b
                pl.BlockSpec((1, Q_pad), lambda b: (0, 0)),       # attn q
            ],
            out_specs=pl.BlockSpec((TB, F_pad), lambda b: (b, 0)),
        ),
        compiler_params=pltpu.CompilerParams(
            dimension_semantics=("parallel",)),
    )(emb, wc, bc, wa, ba, q)

    return out[:B, :F]


def _reference_forward(text, embedding_table, conv_w, conv_b,
                       attn_w, attn_b, attn_q, *, window_size: int):
    """Pure-JAX reference mirroring the PyTorch forward (eval mode)."""
    W = window_size
    pad = (W - 1) // 2
    emb = jnp.take(embedding_table, text, axis=0)             # (B, L, D)
    emb_p = jnp.pad(emb, ((0, 0), (pad, pad), (0, 0)))
    B, L, D = emb.shape
    F = conv_w.shape[2]
    c = jnp.zeros((B, L, F), jnp.float32)
    for w in range(W):
        c = c + jnp.einsum('bld,df->blf', emb_p[:, w:w + L, :], conv_w[w])
    c = jax.nn.relu(c + conv_b.reshape(1, 1, F))               # (B, L, F)
    a = jnp.tanh(jnp.einsum('blf,fq->blq', c, attn_w) + attn_b.reshape(1, 1, -1))
    s = jnp.einsum('blq,q->bl', a, attn_q)                     # (B, L)
    alpha = jax.nn.softmax(s, axis=1)                          # (B, L)
    return jnp.einsum('bl,blf->bf', alpha, c)                  # (B, F)


if __name__ == "__main__":
    # Small, module-consistent shapes (B a multiple of the batch tile so both
    # v7x TensorCores get a grid step).
    B, L = 16, 16                    # batch, num words per text
    V, D = 50, 32                    # vocab size, word_embedding_dim
    F = 20                           # num_filters (exercises lane padding)
    W = 3                            # window_size (odd -> same-length conv)
    Q = 32                           # query_vector_dim
    # dropout_probability -> identity at inference time (no-op here).

    key = jax.random.PRNGKey(0)
    k_emb, k_cw, k_cb, k_aw, k_ab, k_q, k_txt = jax.random.split(key, 7)

    embedding_table = 0.1 * jax.random.normal(k_emb, (V, D), jnp.float32)
    embedding_table = embedding_table.at[0].set(0.0)           # padding_idx=0 row

    # PyTorch Conv2d weight is (F, 1, W, D); we store it as (W, D, F).
    conv_w = 0.1 * jax.random.normal(k_cw, (W, D, F), jnp.float32)
    conv_b = 0.1 * jax.random.normal(k_cb, (F,), jnp.float32)

    attn_w = 0.1 * jax.random.normal(k_aw, (F, Q), jnp.float32)
    attn_b = 0.1 * jax.random.normal(k_ab, (Q,), jnp.float32)
    attn_q = 0.1 * jax.random.normal(k_q, (Q,), jnp.float32)

    text = jax.random.randint(k_txt, (B, L), 0, V, dtype=jnp.int32)

    out = text_encoder_forward(text, embedding_table, conv_w, conv_b,
                               attn_w, attn_b, attn_q, window_size=W,
                               batch_tile=8)
    out = jax.block_until_ready(out)

    ref = _reference_forward(text, embedding_table, conv_w, conv_b,
                             attn_w, attn_b, attn_q, window_size=W)
    assert out.shape == (B, F)
    assert jnp.allclose(out, ref, atol=1e-4, rtol=1e-4), "mismatch vs reference"

    print("KERNEL_OK")
</pallas_src>

<mosaic_0001>
module attributes {stable_mosaic.version = 11 : i64} {
  func.func @_text_encoder_kernel(%arg0: i32, %arg1: memref<8x16x32xf32, #tpu.memory_space<vmem>>, %arg2: memref<96x128xf32, #tpu.memory_space<vmem>>, %arg3: memref<1x128xf32, #tpu.memory_space<vmem>>, %arg4: memref<128x128xf32, #tpu.memory_space<vmem>>, %arg5: memref<1x128xf32, #tpu.memory_space<vmem>>, %arg6: memref<1x128xf32, #tpu.memory_space<vmem>>, %arg7: memref<8x128xf32, #tpu.memory_space<vmem>>) attributes {dimension_semantics = [#tpu.dimension_semantics<parallel>], iteration_bounds = array<i64: 2>, scalar_prefetch = 0 : i64, scratch_operands = 0 : i64, tpu.core_type = #tpu.core_type<tc>, window_params = [{transform_indices = @transform_0, window_bounds = array<i64: 8, 16, 32>}, {pipeline_mode = #tpu.pipeline_mode<synchronous>, transform_indices = @transform_1, window_bounds = array<i64: 96, 128>}, {pipeline_mode = #tpu.pipeline_mode<synchronous>, transform_indices = @transform_2, window_bounds = array<i64: 1, 128>}, {pipeline_mode = #tpu.pipeline_mode<synchronous>, transform_indices = @transform_3, window_bounds = array<i64: 128, 128>}, {pipeline_mode = #tpu.pipeline_mode<synchronous>, transform_indices = @transform_4, window_bounds = array<i64: 1, 128>}, {pipeline_mode = #tpu.pipeline_mode<synchronous>, transform_indices = @transform_5, window_bounds = array<i64: 1, 128>}, {transform_indices = @transform_6, window_bounds = array<i64: 8, 128>}]} {
    %c0 = arith.constant 0 : index
    %c0_0 = arith.constant 0 : index
    %c0_1 = arith.constant 0 : index
    %0 = vector.load %arg1[%c0, %c0_0, %c0_1] : memref<8x16x32xf32, #tpu.memory_space<vmem>>, vector<8x16x32xf32>
    %cst = arith.constant 0.000000e+00 : f32
    %1 = vector.broadcast %cst : f32 to vector<8x1x32xf32>
    %2 = tpu.concatenate %1, %0, %1 in 1 : vector<8x1x32xf32>, vector<8x16x32xf32>, vector<8x1x32xf32> -> vector<8x18x32xf32>
    %3 = vector.extract_strided_slice %2 {offsets = [0, 0, 0], sizes = [8, 16, 32], strides = [1, 1, 1]} : vector<8x18x32xf32> to vector<8x16x32xf32>
    %4 = vector.extract_strided_slice %2 {offsets = [0, 1, 0], sizes = [8, 16, 32], strides = [1, 1, 1]} : vector<8x18x32xf32> to vector<8x16x32xf32>
    %5 = vector.extract_strided_slice %2 {offsets = [0, 2, 0], sizes = [8, 16, 32], strides = [1, 1, 1]} : vector<8x18x32xf32> to vector<8x16x32xf32>
    %6 = tpu.concatenate %3, %4, %5 in 2 : vector<8x16x32xf32>, vector<8x16x32xf32>, vector<8x16x32xf32> -> vector<8x16x96xf32>
    %7 = vector.shape_cast %6 : vector<8x16x96xf32> to vector<128x96xf32>
    %c0_2 = arith.constant 0 : index
    %c0_3 = arith.constant 0 : index
    %8 = vector.load %arg2[%c0_2, %c0_3] : memref<96x128xf32, #tpu.memory_space<vmem>>, vector<96x128xf32>
    %cst_4 = arith.constant dense<0.000000e+00> : vector<128x128xf32>
    %9 = tpu.matmul %7, %8, %cst_4 {dimension_numbers = #tpu.dot_dimension_numbers<[1], [0], [0], [1], [0, 0, 1, 1], [], []>} : vector<128x96xf32>, vector<96x128xf32>, vector<128x128xf32> -> vector<128x128xf32>
    %c0_5 = arith.constant 0 : index
    %c0_6 = arith.constant 0 : index
    %10 = vector.load %arg3[%c0_5, %c0_6] : memref<1x128xf32, #tpu.memory_space<vmem>>, vector<1x128xf32>
    %11 = vector.broadcast %10 : vector<1x128xf32> to vector<128x128xf32>
    %12 = arith.addf %9, %11 : vector<128x128xf32>
    %cst_7 = arith.constant 0.000000e+00 : f32
    %13 = vector.broadcast %cst_7 : f32 to vector<128x128xf32>
    %14 = arith.maximumf %12, %13 : vector<128x128xf32>
    %c0_8 = arith.constant 0 : index
    %c0_9 = arith.constant 0 : index
    %15 = vector.load %arg4[%c0_8, %c0_9] : memref<128x128xf32, #tpu.memory_space<vmem>>, vector<128x128xf32>
    %cst_10 = arith.constant dense<0.000000e+00> : vector<128x128xf32>
    %16 = tpu.matmul %14, %15, %cst_10 {dimension_numbers = #tpu.dot_dimension_numbers<[1], [0], [0], [1], [0, 0, 1, 1], [], []>} : vector<128x128xf32>, vector<128x128xf32>, vector<128x128xf32> -> vector<128x128xf32>
    %c0_11 = arith.constant 0 : index
    %c0_12 = arith.constant 0 : index
    %17 = vector.load %arg5[%c0_11, %c0_12] : memref<1x128xf32, #tpu.memory_space<vmem>>, vector<1x128xf32>
    %18 = vector.broadcast %17 : vector<1x128xf32> to vector<128x128xf32>
    %19 = arith.addf %16, %18 : vector<128x128xf32>
    %20 = math.tanh %19 : vector<128x128xf32>
    %c0_13 = arith.constant 0 : index
    %c0_14 = arith.constant 0 : index
    %21 = vector.load %arg6[%c0_13, %c0_14] : memref<1x128xf32, #tpu.memory_space<vmem>>, vector<1x128xf32>
    %22 = vector.broadcast %21 : vector<1x128xf32> to vector<128x128xf32>
    %23 = arith.mulf %20, %22 : vector<128x128xf32>
    %cst_15 = arith.constant dense<0.000000e+00> : vector<128xf32>
    %24 = vector.multi_reduction <add>, %23, %cst_15 [1] : vector<128x128xf32> to vector<128xf32>
    %25 = vector.shape_cast %24 : vector<128xf32> to vector<128x1xf32>
    %cst_16 = arith.constant dense<0xFF800000> : vector<1xf32>
    %26 = vector.multi_reduction <maximumf>, %25, %cst_16 [0] : vector<128x1xf32> to vector<1xf32>
    %27 = vector.shape_cast %26 : vector<1xf32> to vector<1x1xf32>
    %28 = vector.broadcast %27 : vector<1x1xf32> to vector<128x1xf32>
    %29 = arith.subf %25, %28 : vector<128x1xf32>
    %30 = math.exp %29 : vector<128x1xf32>
    %31 = tpu.iota {dimensions = array<i32: 0>} : vector<8x128xi32>
    %32 = tpu.iota {dimensions = array<i32: 1>} : vector<8x128xi32>
    %c16_i32 = arith.constant 16 : i32
    %33 = vector.broadcast %c16_i32 : i32 to vector<8x128xi32>
    %34 = arith.muli %31, %33 : vector<8x128xi32>
    %35 = arith.cmpi sge, %32, %34 : vector<8x128xi32>
    %c16_i32_17 = arith.constant 16 : i32
    %36 = vector.broadcast %c16_i32_17 : i32 to vector<8x128xi32>
    %37 = arith.addi %34, %36 : vector<8x128xi32>
    %38 = arith.cmpi slt, %32, %37 : vector<8x128xi32>
    %39 = arith.andi %35, %38 : vector<8x128xi1>
    %40 = arith.extui %39 : vector<8x128xi1> to vector<8x128xi32>
    %41 = arith.sitofp %40 : vector<8x128xi32> to vector<8x128xf32>
    %42 = vector.broadcast %30 : vector<128x1xf32> to vector<128x128xf32>
    %43 = arith.mulf %42, %14 : vector<128x128xf32>
    %cst_18 = arith.constant dense<0.000000e+00> : vector<8x128xf32>
    %44 = tpu.matmul %41, %43, %cst_18 {dimension_numbers = #tpu.dot_dimension_numbers<[1], [0], [0], [1], [0, 0, 1, 1], [], []>} : vector<8x128xf32>, vector<128x128xf32>, vector<8x128xf32> -> vector<8x128xf32>
    %cst_19 = arith.constant dense<0.000000e+00> : vector<8x1xf32>
    %45 = tpu.matmul %41, %30, %cst_19 {dimension_numbers = #tpu.dot_dimension_numbers<[1], [0], [0], [1], [0, 0, 1, 1], [], []>} : vector<8x128xf32>, vector<128x1xf32>, vector<8x1xf32> -> vector<8x1xf32>
    %46 = vector.broadcast %45 : vector<8x1xf32> to vector<8x128xf32>
    %47 = arith.divf %44, %46 : vector<8x128xf32>
    %c0_20 = arith.constant 0 : index
    %c0_21 = arith.constant 0 : index
    %48 = vector.load %arg7[%c0_20, %c0_21] : memref<8x128xf32, #tpu.memory_space<vmem>>, vector<8x128xf32>
    tpu.vector_store %arg7[%c0_20, %c0_21], %47 {strides = array<i32>} : memref<8x128xf32, #tpu.memory_space<vmem>>, vector<8x128xf32>,
    return
  }
  func.func @transform_0(%arg0: i32) -> (i32, i32, i32) {
    %c0_i32 = arith.constant 0 : i32
    %c0_i32_0 = arith.constant 0 : i32
    %c0_i32_1 = arith.constant 0 : i32
    return %arg0, %c0_i32, %c0_i32_0 : i32, i32, i32
  }
  func.func @transform_1(%arg0: i32) -> (i32, i32) {
    %c0_i32 = arith.constant 0 : i32
    %c0_i32_0 = arith.constant 0 : i32
    %c0_i32_1 = arith.constant 0 : i32
    return %c0_i32, %c0_i32_0 : i32, i32
  }
  func.func @transform_2(%arg0: i32) -> (i32, i32) {
    %c0_i32 = arith.constant 0 : i32
    %c0_i32_0 = arith.constant 0 : i32
    %c0_i32_1 = arith.constant 0 : i32
    return %c0_i32, %c0_i32_0 : i32, i32
  }
  func.func @transform_3(%arg0: i32) -> (i32, i32) {
    %c0_i32 = arith.constant 0 : i32
    %c0_i32_0 = arith.constant 0 : i32
    %c0_i32_1 = arith.constant 0 : i32
    return %c0_i32, %c0_i32_0 : i32, i32
  }
  func.func @transform_4(%arg0: i32) -> (i32, i32) {
    %c0_i32 = arith.constant 0 : i32
    %c0_i32_0 = arith.constant 0 : i32
    %c0_i32_1 = arith.constant 0 : i32
    return %c0_i32, %c0_i32_0 : i32, i32
  }
  func.func @transform_5(%arg0: i32) -> (i32, i32) {
    %c0_i32 = arith.constant 0 : i32
    %c0_i32_0 = arith.constant 0 : i32
    %c0_i32_1 = arith.constant 0 : i32
    return %c0_i32, %c0_i32_0 : i32, i32
  }
  func.func @transform_6(%arg0: i32) -> (i32, i32) {
    %c0_i32 = arith.constant 0 : i32
    %c0_i32_0 = arith.constant 0 : i32
    return %arg0, %c0_i32 : i32, i32
  }
}

</mosaic_0001>

<llo_original>
// kernel: tpu_custom_call.1
$region0: #{tpu_custom_call.1}
  #allocation0 [shape = 'u32[]', space=smem, size = 0x4, offset = 0x4, fixed_abs, tag = 'smem constant byte address 0x4 - core index']
  #allocation1 [shape = 'u32[72,128]{1,0:T(1,128)}', space=vmem, size = 0x9000, scoped, tag = 'internal scratch']
  %s0 = inlined_call_operand.hbm [shape: f32[16,16,32], index: 0, kind: input, shape index: {}]
  %s1 = inlined_call_operand.hbm [shape: f32[96,128], index: 1, kind: input, shape index: {}]
  %s2 = inlined_call_operand.vmem [shape: f32[1,128], index: 2, kind: input, shape index: {}]
  %s3 = inlined_call_operand.hbm [shape: f32[128,128], index: 3, kind: input, shape index: {}]
  %s4 = inlined_call_operand.vmem [shape: f32[1,128], index: 4, kind: input, shape index: {}]
  %s5 = inlined_call_operand.vmem [shape: f32[1,128], index: 5, kind: input, shape index: {}]
  %s6 = inlined_call_operand.hbm [shape: f32[16,128], index: 6, kind: output, shape index: {}]
  %s7 = sld [smem:[#allocation0]]
  $region69: #{tpu_custom_call.1} parent=0
    _
  %s9 = ssub.s32 1, %s7
  %s10 = scalar_select 0, %s9, %s7
  $region1: #{tpu_custom_call.1} parent=0
    #allocation2 [shape = 'u8[131072]{0}', space=vmem, size = 0x20000, scoped, tag = 'input window, operand 0']
    #allocation3 [shape = 's32[2]{0}', space=sflag, size = 0x8, scoped, tag = 'scoped memory for tpu_custom_call.1']
    #allocation4 [shape = 's32[2]{0}', space=sflag, size = 0x8, scoped, tag = 'scoped memory for tpu_custom_call.1']
    #allocation5 [shape = 'u8[49152]{0}', space=vmem, size = 0xc000, scoped, tag = 'input window, operand 1, single buffered']
    #allocation6 [shape = 's32[1]{0}', space=sflag, size = 0x4, scoped, tag = 'scoped memory for tpu_custom_call.1']
    #allocation7 [shape = 'u8[65536]{0}', space=vmem, size = 0x10000, scoped, tag = 'input window, operand 3, single buffered']
    #allocation8 [shape = 'u8[8192]{0}', space=vmem, size = 0x2000, scoped, tag = 'output window, operand 0']
    %11 = vsyncpa [#allocation3], 0
    %s12 = scalar_lea.sflag [#allocation3], 1
    %13 = vsyncpa %s12, 0
    %14 = vsyncpa [#allocation6], 0
    %15 = vsyncpa [#allocation4], 0
    %s16 = scalar_lea.sflag [#allocation4], 1
    %17 = vsyncpa %s16, 0
    loop: start=0, step=1, limit=4
    $region2: #{tpu_custom_call.1} parent=1 // loop_pre_header
      _
    $region3: #{tpu_custom_call.1} parent=1 // loop_header
      %s19 = sphi 0, %s23
      %p20 = scmp.ge.s32.totalorder %s19, 4
      %s29 = sphi 0, %s31
      %s32 = sphi 0, %s29
      %s33 = sphi 0, %s32
      %s49 = sphi 0, %s33
      %s53 = sphi 0, %s53
      %s55 = sphi 0, %s53
      %s56 = sphi 0, %s55
      %s70 = sphi 0, %s56
      %s74 = sphi 0, %s74
      %s76 = sphi 0, %s74
      %s77 = sphi 0, %s76
      %s91 = sphi 0, %s77
      %s95 = sphi 0, %s95
      %s97 = sphi 0, %s95
      %s98 = sphi 0, %s97
      %s112 = sphi 0, %s98
      %s116 = sphi 0, %s116
      %s118 = sphi 0, %s116
      %s119 = sphi 0, %s118
      %s133 = sphi 0, %s119
      %s137 = sphi 0, %s137
      %s139 = sphi 0, %s137
      %s140 = sphi 0, %s139
      %s154 = sphi 0, %s140
      %s160 = sphi 0, %s162
      %s163 = sphi 0, %s160
      %s164 = sphi 0, %s163
      %s180 = sphi 0, %s164
    $region4: #{tpu_custom_call.1} parent=1 // loop_header_branch
      %22 = sbr.rel (%p20) target = $region8
    $region5: #{tpu_custom_call.1} parent=1 // loop_body
      %s24 = ssub.s32 %s19, 1
      %s25 = ssub.s32 %s19, 2
      %s26 = sadd.s32 %s19, 1
      %s27 = ssub.s32 %s19, %s26
      %p28 = scmp.eq.s32.totalorder %s27, 0
      %s30 = sadd.s32 %s29, 1
      %s31 = scalar_select %p28, %s29, %s30
      %p34 = pneg %p28
      %p35 = scmp.eq.s32.totalorder %s19, 1
      %p36 = por %p34, %p35
      %p37 = scmp.ne.s32.totalorder %s29, %s32
      %p38 = scmp.eq.s32.totalorder %s19, 0
      %p39 = por %p37, %p38
      %p40 = scmp.ne.s32.totalorder %s29, %s32
      %p41 = scmp.eq.s32.totalorder %s24, 1
      %p42 = por %p40, %p41
      %p43 = scmp.ne.s32.totalorder %s32, %s33
      %p44 = scmp.eq.s32.totalorder %s24, 0
      %p45 = por %p43, %p44
      %p46 = scmp.ne.s32.totalorder %s32, %s33
      %p47 = scmp.eq.s32.totalorder %s25, 1
      %p48 = por %p46, %p47
      %p50 = scmp.ne.s32.totalorder %s33, %s49
      %p51 = scmp.eq.s32.totalorder %s25, 0
      %p52 = por %p50, %p51
      %s54 = sadd.s32 %s53, 1
      %p57 = scmp.eq.s32.totalorder %s19, 1
      %p58 = scmp.ne.s32.totalorder %s53, %s55
      %p59 = scmp.eq.s32.totalorder %s19, 0
      %p60 = por %p58, %p59
      %p61 = scmp.ne.s32.totalorder %s53, %s55
      %p62 = scmp.eq.s32.totalorder %s24, 1
      %p63 = por %p61, %p62
      %p64 = scmp.ne.s32.totalorder %s55, %s56
      %p65 = scmp.eq.s32.totalorder %s24, 0
      %p66 = por %p64, %p65
      %p67 = scmp.ne.s32.totalorder %s55, %s56
      %p68 = scmp.eq.s32.totalorder %s25, 1
      %p69 = por %p67, %p68
      %p71 = scmp.ne.s32.totalorder %s56, %s70
      %p72 = scmp.eq.s32.totalorder %s25, 0
      %p73 = por %p71, %p72
      %s75 = sadd.s32 %s74, 1
      %p78 = scmp.eq.s32.totalorder %s19, 1
      %p79 = scmp.ne.s32.totalorder %s74, %s76
      %p80 = scmp.eq.s32.totalorder %s19, 0
      %p81 = por %p79, %p80
      %p82 = scmp.ne.s32.totalorder %s74, %s76
      %p83 = scmp.eq.s32.totalorder %s24, 1
      %p84 = por %p82, %p83
      %p85 = scmp.ne.s32.totalorder %s76, %s77
      %p86 = scmp.eq.s32.totalorder %s24, 0
      %p87 = por %p85, %p86
      %p88 = scmp.ne.s32.totalorder %s76, %s77
      %p89 = scmp.eq.s32.totalorder %s25, 1
      %p90 = por %p88, %p89
      %p92 = scmp.ne.s32.totalorder %s77, %s91
      %p93 = scmp.eq.s32.totalorder %s25, 0
      %p94 = por %p92, %p93
      %s96 = sadd.s32 %s95, 1
      %p99 = scmp.eq.s32.totalorder %s19, 1
      %p100 = scmp.ne.s32.totalorder %s95, %s97
      %p101 = scmp.eq.s32.totalorder %s19, 0
      %p102 = por %p100, %p101
      %p103 = scmp.ne.s32.totalorder %s95, %s97
      %p104 = scmp.eq.s32.totalorder %s24, 1
      %p105 = por %p103, %p104
      %p106 = scmp.ne.s32.totalorder %s97, %s98
      %p107 = scmp.eq.s32.totalorder %s24, 0
      %p108 = por %p106, %p107
      %p109 = scmp.ne.s32.totalorder %s97, %s98
      %p110 = scmp.eq.s32.totalorder %s25, 1
      %p111 = por %p109, %p110
      %p113 = scmp.ne.s32.totalorder %s98, %s112
      %p114 = scmp.eq.s32.totalorder %s25, 0
      %p115 = por %p113, %p114
      %s117 = sadd.s32 %s116, 1
      %p120 = scmp.eq.s32.totalorder %s19, 1
      %p121 = scmp.ne.s32.totalorder %s116, %s118
      %p122 = scmp.eq.s32.totalorder %s19, 0
      %p123 = por %p121, %p122
      %p124 = scmp.ne.s32.totalorder %s116, %s118
      %p125 = scmp.eq.s32.totalorder %s24, 1
      %p126 = por %p124, %p125
      %p127 = scmp.ne.s32.totalorder %s118, %s119
      %p128 = scmp.eq.s32.totalorder %s24, 0
      %p129 = por %p127, %p128
      %p130 = scmp.ne.s32.totalorder %s118, %s119
      %p131 = scmp.eq.s32.totalorder %s25, 1
      %p132 = por %p130, %p131
      %p134 = scmp.ne.s32.totalorder %s119, %s133
      %p135 = scmp.eq.s32.totalorder %s25, 0
      %p136 = por %p134, %p135
      %s138 = sadd.s32 %s137, 1
      %p141 = scmp.eq.s32.totalorder %s19, 1
      %p142 = scmp.ne.s32.totalorder %s137, %s139
      %p143 = scmp.eq.s32.totalorder %s19, 0
      %p144 = por %p142, %p143
      %p145 = scmp.ne.s32.totalorder %s137, %s139
      %p146 = scmp.eq.s32.totalorder %s24, 1
      %p147 = por %p145, %p146
      %p148 = scmp.ne.s32.totalorder %s139, %s140
      %p149 = scmp.eq.s32.totalorder %s24, 0
      %p150 = por %p148, %p149
      %p151 = scmp.ne.s32.totalorder %s139, %s140
      %p152 = scmp.eq.s32.totalorder %s25, 1
      %p153 = por %p151, %p152
      %p155 = scmp.ne.s32.totalorder %s140, %s154
      %p156 = scmp.eq.s32.totalorder %s25, 0
      %p157 = por %p155, %p156
      %s158 = ssub.s32 %s19, %s26
      %p159 = scmp.eq.s32.totalorder %s158, 0
      %s161 = sadd.s32 %s160, 1
      %s162 = scalar_select %p159, %s160, %s161
      %p165 = pneg %p159
      %p166 = scmp.eq.s32.totalorder %s19, 1
      %p167 = por %p165, %p166
      %p168 = scmp.ne.s32.totalorder %s160, %s163
      %p169 = scmp.eq.s32.totalorder %s19, 0
      %p170 = por %p168, %p169
      %p171 = scmp.ne.s32.totalorder %s160, %s163
      %p172 = scmp.eq.s32.totalorder %s24, 1
      %p173 = por %p171, %p172
      %p174 = scmp.ne.s32.totalorder %s163, %s164
      %p175 = scmp.eq.s32.totalorder %s24, 0
      %p176 = por %p174, %p175
      %p177 = scmp.ne.s32.totalorder %s163, %s164
      %p178 = scmp.eq.s32.totalorder %s25, 1
      %p179 = por %p177, %p178
      %p181 = scmp.ne.s32.totalorder %s164, %s180
      %p182 = scmp.eq.s32.totalorder %s25, 0
      %p183 = por %p181, %p182
      %p184 = scmp.le.s32.totalorder 1, %s19
      %p185 = scmp.lt.s32.totalorder %s19, 3
      %p186 = pnand %p184, %p185
      %p187 = pneg %p186
      // Predicated region
      $region9: #{tpu_custom_call.1} parent=5 // pred_check
        _
      $region10: #{tpu_custom_call.1} parent=5 // pred_check_branch
        %189 = sbr.rel (%p186) target = $region12
      $region11: #{tpu_custom_call.1} parent=5 // pred_region
        %s190 = ssub.s32 %s19, 1
        // Predicated region
        $region13: #{tpu_custom_call.1} parent=11 // pred_check
          %p191 = pneg %p66
        $region14: #{tpu_custom_call.1} parent=11 // pred_check_branch
          %193 = sbr.rel (%p191) target = $region16
        $region15: #{tpu_custom_call.1} parent=11 // pred_region
          %195 = vsyncadd [#allocation6], 0
          %s196 = sshll.u32 %s1, 4
          %s197 = int_to_ptr.hbm [resolvable:$true] %s196
          %s198 = sshll.u32 [#allocation5], 4
          %s199 = int_to_ptr.vmem [resolvable:$true] %s198
          %204 = dma.hbm_to_vmem [thread:$0]  %s197, 1536, %s199, [#allocation6], 128, 128, 8
        $region16: #{tpu_custom_call.1} parent=11 // pred_fallthru
          _
        // Predicated region
        $region17: #{tpu_custom_call.1} parent=11 // pred_check
          %p205 = pneg %p87
        $region18: #{tpu_custom_call.1} parent=11 // pred_check_branch
          %207 = sbr.rel (%p205) target = $region20
        $region19: #{tpu_custom_call.1} parent=11 // pred_region
          _
        $region20: #{tpu_custom_call.1} parent=11 // pred_fallthru
          _
        // Predicated region
        $region21: #{tpu_custom_call.1} parent=11 // pred_check
          %p208 = pneg %p108
        $region22: #{tpu_custom_call.1} parent=11 // pred_check_branch
          %210 = sbr.rel (%p208) target = $region24
        $region23: #{tpu_custom_call.1} parent=11 // pred_region
          %212 = vsyncadd [#allocation6], 0
          %s213 = sshll.u32 %s3, 4
          %s214 = int_to_ptr.hbm [resolvable:$true] %s213
          %s215 = sshll.u32 [#allocation7], 4
          %s216 = int_to_ptr.vmem [resolvable:$true] %s215
          %221 = dma.hbm_to_vmem [thread:$0]  %s214, 2048, %s216, [#allocation6], 128, 128, 8
        $region24: #{tpu_custom_call.1} parent=11 // pred_fallthru
          _
        // Predicated region
        $region25: #{tpu_custom_call.1} parent=11 // pred_check
          %p222 = pneg %p129
        $region26: #{tpu_custom_call.1} parent=11 // pred_check_branch
          %224 = sbr.rel (%p222) target = $region28
        $region27: #{tpu_custom_call.1} parent=11 // pred_region
          _
        $region28: #{tpu_custom_call.1} parent=11 // pred_fallthru
          _
        // Predicated region
        $region29: #{tpu_custom_call.1} parent=11 // pred_check
          %p225 = pneg %p150
        $region30: #{tpu_custom_call.1} parent=11 // pred_check_branch
          %227 = sbr.rel (%p225) target = $region32
        $region31: #{tpu_custom_call.1} parent=11 // pred_region
          _
        $region32: #{tpu_custom_call.1} parent=11 // pred_fallthru
          _
      $region12: #{tpu_custom_call.1} parent=5 // pred_fallthru
        _
      %p228 = scmp.lt.s32.totalorder %s19, 2
      // Predicated region
      $region33: #{tpu_custom_call.1} parent=5 // pred_check
        %p229 = pneg %p228
      $region34: #{tpu_custom_call.1} parent=5 // pred_check_branch
        %231 = sbr.rel (%p229) target = $region36
      $region35: #{tpu_custom_call.1} parent=5 // pred_region
        // Predicated region
        $region37: #{tpu_custom_call.1} parent=35 // pred_check
          %p232 = pneg %p39
        $region38: #{tpu_custom_call.1} parent=35 // pred_check_branch
          %234 = sbr.rel (%p232) target = $region40
        $region39: #{tpu_custom_call.1} parent=35 // pred_region
          %s235 = sand.u32 %s29, 1
          %s236 = scalar_lea.sflag [#allocation3], %s235
          %s237 = sand.u32 %s29, 1
          %s238 = smul.addr %s237, 128
          %s239 = scalar_lea.vmem [#allocation2], %s238
          %s240 = smul.u32 8, %s19
          %242 = vsyncadd %s236, 0
          %s243 = smul.addr %s240, 2
          %s244 = smul.addr %s243, 8
          %s245 = scalar_lea.hbm %s0, %s244
          %s246 = sshll.u32 %s245, 4
          %s247 = int_to_ptr.hbm [resolvable:$true] %s246
          %s248 = sshll.u32 %s239, 4
          %s249 = int_to_ptr.vmem [resolvable:$true] %s248
          %254 = dma.hbm_to_vmem [thread:$0]  %s247, 2048, %s249, %s236, 128, 128, 8
        $region40: #{tpu_custom_call.1} parent=35 // pred_fallthru
          _
      $region36: #{tpu_custom_call.1} parent=5 // pred_fallthru
        _
      %p255 = scmp.le.s32.totalorder 1, %s19
      %p256 = scmp.lt.s32.totalorder %s19, 3
      %p257 = pnand %p255, %p256
      %p258 = pneg %p257
      // Predicated region
      $region41: #{tpu_custom_call.1} parent=5 // pred_check
        _
      $region42: #{tpu_custom_call.1} parent=5 // pred_check_branch
        %260 = sbr.rel (%p257) target = $region44
      $region43: #{tpu_custom_call.1} parent=5 // pred_region
        %s261 = ssub.s32 %s19, 1
        %s262 = sand.u32 %s32, 1
        %s263 = scalar_lea.sflag [#allocation3], %s262
        %s264 = sand.u32 %s32, 1
        %s265 = smul.addr %s264, 128
        %s266 = scalar_lea.vmem [#allocation2], %s265
        // Predicated region
        $region45: #{tpu_custom_call.1} parent=43 // pred_check
          %p267 = pneg %p45
        $region46: #{tpu_custom_call.1} parent=43 // pred_check_branch
          %269 = sbr.rel (%p267) target = $region48
        $region47: #{tpu_custom_call.1} parent=43 // pred_region
          %271 = dma.done %s263, 2048
        $region48: #{tpu_custom_call.1} parent=43 // pred_fallthru
          _
        // Predicated region
        $region49: #{tpu_custom_call.1} parent=43 // pred_check
          %p272 = pneg %p66
        $region50: #{tpu_custom_call.1} parent=43 // pred_check_branch
          %274 = sbr.rel (%p272) target = $region52
        $region51: #{tpu_custom_call.1} parent=43 // pred_region
          %276 = dma.done [#allocation6], 1536
        $region52: #{tpu_custom_call.1} parent=43 // pred_fallthru
          _
        // Predicated region
        $region53: #{tpu_custom_call.1} parent=43 // pred_check
          %p277 = pneg %p108
        $region54: #{tpu_custom_call.1} parent=43 // pred_check_branch
          %279 = sbr.rel (%p277) target = $region56
        $region55: #{tpu_custom_call.1} parent=43 // pred_region
          %281 = dma.done [#allocation6], 2048
        $region56: #{tpu_custom_call.1} parent=43 // pred_fallthru
          _
        %s282 = sand.u32 %s32, 1
        %s283 = scalar_lea.sflag [#allocation3], %s282
        %s284 = sand.u32 %s32, 1
        %s285 = smul.addr %s284, 128
        %s286 = scalar_lea.vmem [#allocation2], %s285
        %p287 = pneg %p45
        %p288 = pneg %p42
        %p289 = pneg %p66
        %p290 = pneg %p63
        %p291 = pneg %p87
        %p292 = pneg %p84
        %p293 = pneg %p108
        %p294 = pneg %p105
        %p295 = pneg %p129
        %p296 = pneg %p126
        %p297 = pneg %p150
        %p298 = pneg %p147
        %p299 = pneg %p176
        %p300 = pneg %p173
        %s301 = sand.u32 %s163, 1
        %s302 = scalar_lea.sflag [#allocation4], %s301
        %s303 = sand.u32 %s163, 1
        %s304 = smul.addr %s303, 8
        %s305 = scalar_lea.vmem [#allocation8], %s304
        %s306 = smul.u32 8, %s24
        %v307 = vld [vmem:[%s266] sm:$0xff]
        %v308 = vld [vmem:[%s266 + $0x8] sm:$0xff]
        %v309 = vld [vmem:[%s266 + $0x10] sm:$0xff]
        %v310 = vld [vmem:[%s266 + $0x18] sm:$0xff]
        %v311 = vld [vmem:[%s266 + $0x20] sm:$0xff]
        %v312 = vld [vmem:[%s266 + $0x28] sm:$0xff]
        %v313 = vld [vmem:[%s266 + $0x30] sm:$0xff]
        %v314 = vld [vmem:[%s266 + $0x38] sm:$0xff]
        %v315 = vld [vmem:[%s266 + $0x40] sm:$0xff]
        %v316 = vld [vmem:[%s266 + $0x48] sm:$0xff]
        %v317 = vld [vmem:[%s266 + $0x50] sm:$0xff]
        %v318 = vld [vmem:[%s266 + $0x58] sm:$0xff]
        %v319 = vld [vmem:[%s266 + $0x60] sm:$0xff]
        %v320 = vld [vmem:[%s266 + $0x68] sm:$0xff]
        %v321 = vld [vmem:[%s266 + $0x70] sm:$0xff]
        %v322 = vld [vmem:[%s266 + $0x78] sm:$0xff]
        %vm339 = vcmask 1040384
        %v340 = vrot.slane %v307, 7
        %v341 = vrot.slane %v308, 7
        %v342 = vsel %vm339, %v340, %v341
        %v343 = vrot.slane %v309, 7
        %v344 = vrot.slane %v310, 7
        %v345 = vsel %vm339, %v343, %v344
        %v346 = vrot.slane %v311, 7
        %v347 = vrot.slane %v312, 7
        %v348 = vsel %vm339, %v346, %v347
        %v349 = vrot.slane %v313, 7
        %v350 = vrot.slane %v314, 7
        %v351 = vsel %vm339, %v349, %v350
        %v352 = vrot.slane %v315, 7
        %v353 = vrot.slane %v316, 7
        %v354 = vsel %vm339, %v352, %v353
        %v355 = vrot.slane %v317, 7
        %v356 = vrot.slane %v318, 7
        %v357 = vsel %vm339, %v355, %v356
        %v358 = vrot.slane %v319, 7
        %v359 = vrot.slane %v320, 7
        %v360 = vsel %vm339, %v358, %v359
        %v361 = vrot.slane %v321, 7
        %v362 = vrot.slane %v322, 7
        %v363 = vsel %vm339, %v361, %v362
        %v388 = vsel %vm339, 0.0, %v340
        %v389 = vsel %vm339, 0.0, %v343
        %v390 = vsel %vm339, 0.0, %v346
        %v391 = vsel %vm339, 0.0, %v349
        %v392 = vsel %vm339, 0.0, %v352
        %v393 = vsel %vm339, 0.0, %v355
        %v394 = vsel %vm339, 0.0, %v358
        %v395 = vsel %vm339, 0.0, %v361
        %v396 = vsel %vm339, %v341, 0.0
        %v397 = vsel %vm339, %v344, 0.0
        %v398 = vsel %vm339, %v347, 0.0
        %v399 = vsel %vm339, %v350, 0.0
        %v400 = vsel %vm339, %v353, 0.0
        %v401 = vsel %vm339, %v356, 0.0
        %v402 = vsel %vm339, %v359, 0.0
        %v403 = vsel %vm339, %v362, 0.0
        %vm420 = vcmask 1046528
        %v421 = vrot.slane %v388, 1
        %v422 = vrot.slane %v342, 1
        %v423 = vsel %vm420, %v421, %v422
        %v424 = vrot.slane %v396, 1
        %v425 = vsel %vm420, %v422, %v424
        %v426 = vrot.slane %v389, 1
        %v427 = vrot.slane %v345, 1
        %v428 = vsel %vm420, %v426, %v427
        %v429 = vrot.slane %v397, 1
        %v430 = vsel %vm420, %v427, %v429
        %v431 = vrot.slane %v390, 1
        %v432 = vrot.slane %v348, 1
        %v433 = vsel %vm420, %v431, %v432
        %v434 = vrot.slane %v398, 1
        %v435 = vsel %vm420, %v432, %v434
        %v436 = vrot.slane %v391, 1
        %v437 = vrot.slane %v351, 1
        %v438 = vsel %vm420, %v436, %v437
        %v439 = vrot.slane %v399, 1
        %v440 = vsel %vm420, %v437, %v439
        %v441 = vrot.slane %v392, 1
        %v442 = vrot.slane %v354, 1
        %v443 = vsel %vm420, %v441, %v442
        %v444 = vrot.slane %v400, 1
        %v445 = vsel %vm420, %v442, %v444
        %v446 = vrot.slane %v393, 1
        %v447 = vrot.slane %v357, 1
        %v448 = vsel %vm420, %v446, %v447
        %v449 = vrot.slane %v401, 1
        %v450 = vsel %vm420, %v447, %v449
        %v451 = vrot.slane %v394, 1
        %v452 = vrot.slane %v360, 1
        %v453 = vsel %vm420, %v451, %v452
        %v454 = vrot.slane %v402, 1
        %v455 = vsel %vm420, %v452, %v454
        %v456 = vrot.slane %v395, 1
        %v457 = vrot.slane %v363, 1
        %v458 = vsel %vm420, %v456, %v457
        %v459 = vrot.slane %v403, 1
        %v460 = vsel %vm420, %v457, %v459
        %461 = vrot.lane.b32.xlu0 %v423, 32
        %v462 = vpop.permute.xlu0 %461
        %463 = vrot.lane.b32.xlu0 %v425, 32
        %v464 = vpop.permute.xlu0 %463
        %465 = vrot.lane.b32.xlu0 %v428, 32
        %v466 = vpop.permute.xlu0 %465
        %467 = vrot.lane.b32.xlu0 %v430, 32
        %v468 = vpop.permute.xlu0 %467
        %469 = vrot.lane.b32.xlu0 %v433, 32
        %v470 = vpop.permute.xlu0 %469
        %471 = vrot.lane.b32.xlu0 %v435, 32
        %v472 = vpop.permute.xlu0 %471
        %473 = vrot.lane.b32.xlu0 %v438, 32
        %v474 = vpop.permute.xlu0 %473
        %475 = vrot.lane.b32.xlu0 %v440, 32
        %v476 = vpop.permute.xlu0 %475
        %477 = vrot.lane.b32.xlu0 %v443, 32
        %v478 = vpop.permute.xlu0 %477
        %479 = vrot.lane.b32.xlu0 %v445, 32
        %v480 = vpop.permute.xlu0 %479
        %481 = vrot.lane.b32.xlu0 %v448, 32
        %v482 = vpop.permute.xlu0 %481
        %483 = vrot.lane.b32.xlu0 %v450, 32
        %v484 = vpop.permute.xlu0 %483
        %485 = vrot.lane.b32.xlu0 %v453, 32
        %v486 = vpop.permute.xlu0 %485
        %487 = vrot.lane.b32.xlu0 %v455, 32
        %v488 = vpop.permute.xlu0 %487
        %489 = vrot.lane.b32.xlu0 %v458, 32
        %v490 = vpop.permute.xlu0 %489
        %491 = vrot.lane.b32.xlu0 %v460, 32
        %v492 = vpop.permute.xlu0 %491
        %vm509 = vcmask 1045504
        %v510 = vrot.slane %v388, 2
        %v511 = vrot.slane %v342, 2
        %v512 = vsel %vm509, %v510, %v511
        %v513 = vrot.slane %v396, 2
        %v514 = vsel %vm509, %v511, %v513
        %v515 = vrot.slane %v389, 2
        %v516 = vrot.slane %v345, 2
        %v517 = vsel %vm509, %v515, %v516
        %v518 = vrot.slane %v397, 2
        %v519 = vsel %vm509, %v516, %v518
        %v520 = vrot.slane %v390, 2
        %v521 = vrot.slane %v348, 2
        %v522 = vsel %vm509, %v520, %v521
        %v523 = vrot.slane %v398, 2
        %v524 = vsel %vm509, %v521, %v523
        %v525 = vrot.slane %v391, 2
        %v526 = vrot.slane %v351, 2
        %v527 = vsel %vm509, %v525, %v526
        %v528 = vrot.slane %v399, 2
        %v529 = vsel %vm509, %v526, %v528
        %v530 = vrot.slane %v392, 2
        %v531 = vrot.slane %v354, 2
        %v532 = vsel %vm509, %v530, %v531
        %v533 = vrot.slane %v400, 2
        %v534 = vsel %vm509, %v531, %v533
        %v535 = vrot.slane %v393, 2
        %v536 = vrot.slane %v357, 2
        %v537 = vsel %vm509, %v535, %v536
        %v538 = vrot.slane %v401, 2
        %v539 = vsel %vm509, %v536, %v538
        %v540 = vrot.slane %v394, 2
        %v541 = vrot.slane %v360, 2
        %v542 = vsel %vm509, %v540, %v541
        %v543 = vrot.slane %v402, 2
        %v544 = vsel %vm509, %v541, %v543
        %v545 = vrot.slane %v395, 2
        %v546 = vrot.slane %v363, 2
        %v547 = vsel %vm509, %v545, %v546
        %v548 = vrot.slane %v403, 2
        %v549 = vsel %vm509, %v546, %v548
        %550 = vrot.lane.b32.xlu0 %v512, 64
        %v551 = vpop.permute.xlu0 %550
        %552 = vrot.lane.b32.xlu0 %v514, 64
        %v553 = vpop.permute.xlu0 %552
        %554 = vrot.lane.b32.xlu0 %v517, 64
        %v555 = vpop.permute.xlu0 %554
        %556 = vrot.lane.b32.xlu0 %v519, 64
        %v557 = vpop.permute.xlu0 %556
        %558 = vrot.lane.b32.xlu0 %v522, 64
        %v559 = vpop.permute.xlu0 %558
        %560 = vrot.lane.b32.xlu0 %v524, 64
        %v561 = vpop.permute.xlu0 %560
        %562 = vrot.lane.b32.xlu0 %v527, 64
        %v563 = vpop.permute.xlu0 %562
        %564 = vrot.lane.b32.xlu0 %v529, 64
        %v565 = vpop.permute.xlu0 %564
        %566 = vrot.lane.b32.xlu0 %v532, 64
        %v567 = vpop.permute.xlu0 %566
        %568 = vrot.lane.b32.xlu0 %v534, 64
        %v569 = vpop.permute.xlu0 %568
        %570 = vrot.lane.b32.xlu0 %v537, 64
        %v571 = vpop.permute.xlu0 %570
        %572 = vrot.lane.b32.xlu0 %v539, 64
        %v573 = vpop.permute.xlu0 %572
        %574 = vrot.lane.b32.xlu0 %v542, 64
        %v575 = vpop.permute.xlu0 %574
        %576 = vrot.lane.b32.xlu0 %v544, 64
        %v577 = vpop.permute.xlu0 %576
        %578 = vrot.lane.b32.xlu0 %v547, 64
        %v579 = vpop.permute.xlu0 %578
        %580 = vrot.lane.b32.xlu0 %v549, 64
        %v581 = vpop.permute.xlu0 %580
        %vm598 = vcmask 261120
        %v599 = vsel %vm598, %v388, %v462
        %v600 = vsel %vm598, %v342, %v464
        %v601 = vsel %vm598, %v389, %v466
        %v602 = vsel %vm598, %v345, %v468
        %v603 = vsel %vm598, %v390, %v470
        %v604 = vsel %vm598, %v348, %v472
        %v605 = vsel %vm598, %v391, %v474
        %v606 = vsel %vm598, %v351, %v476
        %v607 = vsel %vm598, %v392, %v478
        %v608 = vsel %vm598, %v354, %v480
        %v609 = vsel %vm598, %v393, %v482
        %v610 = vsel %vm598, %v357, %v484
        %v611 = vsel %vm598, %v394, %v486
        %v612 = vsel %vm598, %v360, %v488
        %v613 = vsel %vm598, %v395, %v490
        %v614 = vsel %vm598, %v363, %v492
        %vm615 = vcmask 523264
        %v616 = vsel %vm615, %v599, %v551
        %v617 = vsel %vm615, %v600, %v553
        %v618 = vsel %vm615, %v601, %v555
        %v619 = vsel %vm615, %v602, %v557
        %v620 = vsel %vm615, %v603, %v559
        %v621 = vsel %vm615, %v604, %v561
        %v622 = vsel %vm615, %v605, %v563
        %v623 = vsel %vm615, %v606, %v565
        %v624 = vsel %vm615, %v607, %v567
        %v625 = vsel %vm615, %v608, %v569
        %v626 = vsel %vm615, %v609, %v571
        %v627 = vsel %vm615, %v610, %v573
        %v628 = vsel %vm615, %v611, %v575
        %v629 = vsel %vm615, %v612, %v577
        %v630 = vsel %vm615, %v613, %v579
        %v631 = vsel %vm615, %v614, %v581
        %v632 = vld [vmem:[#allocation5] sm:$0xff]
        %v633 = vld [vmem:[#allocation5 + $0x8] sm:$0xff]
        %v634 = vld [vmem:[#allocation5 + $0x10] sm:$0xff]
        %v635 = vld [vmem:[#allocation5 + $0x18] sm:$0xff]
        %v636 = vld [vmem:[#allocation5 + $0x20] sm:$0xff]
        %v637 = vld [vmem:[#allocation5 + $0x28] sm:$0xff]
        %v638 = vld [vmem:[#allocation5 + $0x30] sm:$0xff]
        %v639 = vld [vmem:[#allocation5 + $0x38] sm:$0xff]
        %v640 = vld [vmem:[#allocation5 + $0x40] sm:$0xff]
        %v641 = vld [vmem:[#allocation5 + $0x48] sm:$0xff]
        %v642 = vld [vmem:[#allocation5 + $0x50] sm:$0xff]
        %v643 = vld [vmem:[#allocation5 + $0x58] sm:$0xff]
        %v644 = vld [vmem:[%s2] sm:$0x1]
        %v646 = vperm.slane %v644, 0
        %vm648 = vcmask 785408
        %v650 = vsel %vm648, %v616, 0
        %v653 = vsel %vm648, %v617, 0
        %v656 = vsel %vm648, %v618, 0
        %v659 = vsel %vm648, %v619, 0
        %v662 = vsel %vm648, %v620, 0
        %v665 = vsel %vm648, %v621, 0
        %v668 = vsel %vm648, %v622, 0
        %v671 = vsel %vm648, %v623, 0
        %v674 = vsel %vm648, %v624, 0
        %v677 = vsel %vm648, %v625, 0
        %v680 = vsel %vm648, %v626, 0
        %v683 = vsel %vm648, %v627, 0
        %v686 = vsel %vm648, %v628, 0
        %v689 = vsel %vm648, %v629, 0
        %v692 = vsel %vm648, %v630, 0
        %v695 = vsel %vm648, %v631, 0
        %697 = vmatpush.msra.mxu0 0.0
        %698 = vmatpush.msra.mxu0 0.0
        %699 = vmatpush.msra.mxu0 0.0
        %700 = vmatpush.msra.mxu0 0.0
        %701 = vmatpush.msra.mxu0 %v643
        %702 = vmatpush.msra.mxu0 %v642
        %703 = vmatpush.msra.mxu0 %v641
        %704 = vmatpush.msra.mxu0 %v640
        %705 = vmatpush.msra.mxu0 %v639
        %706 = vmatpush.msra.mxu0 %v638
        %707 = vmatpush.msra.mxu0 %v637
        %708 = vmatpush.msra.mxu0 %v636
        %709 = vmatpush.msra.mxu0 %v635
        %710 = vmatpush.msra.mxu0 %v634
        %711 = vmatpush.msra.mxu0 %v633
        %712 = vmatpush.msra.mxu0 %v632
        %713 = vmatmul.f32.gmra.mxu0 %v650
        %v714 = vpop.f32.mrf.mxu0
        %v715 = vadd.f32 %v646, %v714
        %716 = vmatmul.f32.gmra.mxu0 %v653
        %v717 = vpop.f32.mrf.mxu0
        %v718 = vadd.f32 %v646, %v717
        %719 = vmatmul.f32.gmra.mxu0 %v656
        %v720 = vpop.f32.mrf.mxu0
        %v721 = vadd.f32 %v646, %v720
        %722 = vmatmul.f32.gmra.mxu0 %v659
        %v723 = vpop.f32.mrf.mxu0
        %v724 = vadd.f32 %v646, %v723
        %725 = vmatmul.f32.gmra.mxu0 %v662
        %v726 = vpop.f32.mrf.mxu0
        %v727 = vadd.f32 %v646, %v726
        %728 = vmatmul.f32.gmra.mxu0 %v665
        %v729 = vpop.f32.mrf.mxu0
        %v730 = vadd.f32 %v646, %v729
        %731 = vmatmul.f32.gmra.mxu0 %v668
        %v732 = vpop.f32.mrf.mxu0
        %v733 = vadd.f32 %v646, %v732
        %734 = vmatmul.f32.gmra.mxu0 %v671
        %v735 = vpop.f32.mrf.mxu0
        %v736 = vadd.f32 %v646, %v735
        %737 = vmatmul.f32.gmra.mxu0 %v674
        %v738 = vpop.f32.mrf.mxu0
        %v739 = vadd.f32 %v646, %v738
        %740 = vmatmul.f32.gmra.mxu0 %v677
        %v741 = vpop.f32.mrf.mxu0
        %v742 = vadd.f32 %v646, %v741
        %743 = vmatmul.f32.gmra.mxu0 %v680
        %v744 = vpop.f32.mrf.mxu0
        %v745 = vadd.f32 %v646, %v744
        %746 = vmatmul.f32.gmra.mxu0 %v683
        %v747 = vpop.f32.mrf.mxu0
        %v748 = vadd.f32 %v646, %v747
        %749 = vmatmul.f32.gmra.mxu0 %v686
        %v750 = vpop.f32.mrf.mxu0
        %v751 = vadd.f32 %v646, %v750
        %752 = vmatmul.f32.gmra.mxu0 %v689
        %v753 = vpop.f32.mrf.mxu0
        %v754 = vadd.f32 %v646, %v753
        %755 = vmatmul.f32.gmra.mxu0 %v692
        %v756 = vpop.f32.mrf.mxu0
        %v757 = vadd.f32 %v646, %v756
        %758 = vmatmul.f32.gmra.mxu0 %v695
        %v759 = vpop.f32.mrf.mxu0
        %v760 = vadd.f32 %v646, %v759
        %761 = vdwg.mxu0
        %v762 = vmax.f32 %v715, 0.0
        %v763 = vmax.f32 %v718, 0.0
        %v764 = vmax.f32 %v721, 0.0
        %v765 = vmax.f32 %v724, 0.0
        %v766 = vmax.f32 %v727, 0.0
        %v767 = vmax.f32 %v730, 0.0
        %v768 = vmax.f32 %v733, 0.0
        %v769 = vmax.f32 %v736, 0.0
        %v770 = vmax.f32 %v739, 0.0
        %v771 = vmax.f32 %v742, 0.0
        %v772 = vmax.f32 %v745, 0.0
        %v773 = vmax.f32 %v748, 0.0
        %v774 = vmax.f32 %v751, 0.0
        %v775 = vmax.f32 %v754, 0.0
        %v776 = vmax.f32 %v757, 0.0
        %v777 = vmax.f32 %v760, 0.0
        %v778 = vld [vmem:[#allocation7] sm:$0xff]
        %v779 = vld [vmem:[#allocation7 + $0x8] sm:$0xff]
        %v780 = vld [vmem:[#allocation7 + $0x10] sm:$0xff]
        %v781 = vld [vmem:[#allocation7 + $0x18] sm:$0xff]
        %v782 = vld [vmem:[#allocation7 + $0x20] sm:$0xff]
        %v783 = vld [vmem:[#allocation7 + $0x28] sm:$0xff]
        %v784 = vld [vmem:[#allocation7 + $0x30] sm:$0xff]
        %v785 = vld [vmem:[#allocation7 + $0x38] sm:$0xff]
        %v786 = vld [vmem:[#allocation7 + $0x40] sm:$0xff]
        %v787 = vld [vmem:[#allocation7 + $0x48] sm:$0xff]
        %v788 = vld [vmem:[#allocation7 + $0x50] sm:$0xff]
        %v789 = vld [vmem:[#allocation7 + $0x58] sm:$0xff]
        %v790 = vld [vmem:[#allocation7 + $0x60] sm:$0xff]
        %v791 = vld [vmem:[#allocation7 + $0x68] sm:$0xff]
        %v792 = vld [vmem:[#allocation7 + $0x70] sm:$0xff]
        %v793 = vld [vmem:[#allocation7 + $0x78] sm:$0xff]
        %v794 = vld [vmem:[%s4] sm:$0x1]
        %v796 = vperm.slane %v794, 0
        %798 = vmatpush.msra.mxu0 %v793
        %799 = vmatpush.msra.mxu0 %v792
        %800 = vmatpush.msra.mxu0 %v791
        %801 = vmatpush.msra.mxu0 %v790
        %802 = vmatpush.msra.mxu0 %v789
        %803 = vmatpush.msra.mxu0 %v788
        %804 = vmatpush.msra.mxu0 %v787
        %805 = vmatpush.msra.mxu0 %v786
        %806 = vmatpush.msra.mxu0 %v785
        %807 = vmatpush.msra.mxu0 %v784
        %808 = vmatpush.msra.mxu0 %v783
        %809 = vmatpush.msra.mxu0 %v782
        %810 = vmatpush.msra.mxu0 %v781
        %811 = vmatpush.msra.mxu0 %v780
        %812 = vmatpush.msra.mxu0 %v779
        %813 = vmatpush.msra.mxu0 %v778
        %814 = vmatmul.f32.gmra.mxu0 %v762
        %v815 = vpop.f32.mrf.mxu0
        %v816 = vadd.f32 %v796, %v815
        %817 = vmatmul.f32.gmra.mxu0 %v763
        %v818 = vpop.f32.mrf.mxu0
        %v819 = vadd.f32 %v796, %v818
        %820 = vmatmul.f32.gmra.mxu0 %v764
        %v821 = vpop.f32.mrf.mxu0
        %v822 = vadd.f32 %v796, %v821
        %823 = vmatmul.f32.gmra.mxu0 %v765
        %v824 = vpop.f32.mrf.mxu0
        %v825 = vadd.f32 %v796, %v824
        %826 = vmatmul.f32.gmra.mxu0 %v766
        %v827 = vpop.f32.mrf.mxu0
        %v828 = vadd.f32 %v796, %v827
        %829 = vmatmul.f32.gmra.mxu0 %v767
        %v830 = vpop.f32.mrf.mxu0
        %v831 = vadd.f32 %v796, %v830
        %832 = vmatmul.f32.gmra.mxu0 %v768
        %v833 = vpop.f32.mrf.mxu0
        %v834 = vadd.f32 %v796, %v833
        %835 = vmatmul.f32.gmra.mxu0 %v769
        %v836 = vpop.f32.mrf.mxu0
        %v837 = vadd.f32 %v796, %v836
        %838 = vmatmul.f32.gmra.mxu0 %v770
        %v839 = vpop.f32.mrf.mxu0
        %v840 = vadd.f32 %v796, %v839
        %841 = vmatmul.f32.gmra.mxu0 %v771
        %v842 = vpop.f32.mrf.mxu0
        %v843 = vadd.f32 %v796, %v842
        %844 = vmatmul.f32.gmra.mxu0 %v772
        %v845 = vpop.f32.mrf.mxu0
        %v846 = vadd.f32 %v796, %v845
        %847 = vmatmul.f32.gmra.mxu0 %v773
        %v848 = vpop.f32.mrf.mxu0
        %v849 = vadd.f32 %v796, %v848
        %850 = vmatmul.f32.gmra.mxu0 %v774
        %v851 = vpop.f32.mrf.mxu0
        %v852 = vadd.f32 %v796, %v851
        %853 = vmatmul.f32.gmra.mxu0 %v775
        %v854 = vpop.f32.mrf.mxu0
        %v855 = vadd.f32 %v796, %v854
        %856 = vmatmul.f32.gmra.mxu0 %v776
        %v857 = vpop.f32.mrf.mxu0
        %v858 = vadd.f32 %v796, %v857
        %859 = vmatmul.f32.gmra.mxu0 %v777
        %v860 = vpop.f32.mrf.mxu0
        %v861 = vadd.f32 %v796, %v860
        %862 = vdwg.mxu0
        %v863 = vtanh.pop %v816
        %v864 = vtanh.pop %v819
        %v865 = vtanh.pop %v822
        %v866 = vtanh.pop %v825
        %v867 = vtanh.pop %v828
        %v868 = vtanh.pop %v831
        %v869 = vtanh.pop %v834
        %v870 = vtanh.pop %v837
        %v871 = vtanh.pop %v840
        %v872 = vtanh.pop %v843
        %v873 = vtanh.pop %v846
        %v874 = vtanh.pop %v849
        %v875 = vtanh.pop %v852
        %v876 = vtanh.pop %v855
        %v877 = vtanh.pop %v858
        %v878 = vtanh.pop %v861
        %v879 = vld [vmem:[%s5] sm:$0x1]
        %v881 = vperm.slane %v879, 0
        %v883 = vmul.f32 %v863, %v881
        %v884 = vmul.f32 %v864, %v881
        %v885 = vmul.f32 %v865, %v881
        %v886 = vmul.f32 %v866, %v881
        %v887 = vmul.f32 %v867, %v881
        %v888 = vmul.f32 %v868, %v881
        %v889 = vmul.f32 %v869, %v881
        %v890 = vmul.f32 %v870, %v881
        %v891 = vmul.f32 %v871, %v881
        %v892 = vmul.f32 %v872, %v881
        %v893 = vmul.f32 %v873, %v881
        %v894 = vmul.f32 %v874, %v881
        %v895 = vmul.f32 %v875, %v881
        %v896 = vmul.f32 %v876, %v881
        %v897 = vmul.f32 %v877, %v881
        %v898 = vmul.f32 %v878, %v881
        %899 = vadd.xlane.f32.xlu0 %v883
        %v900 = vpop.xlane.xlu0 %899
        %901 = vadd.xlane.f32.xlu0 %v884
        %v902 = vpop.xlane.xlu0 %901
        %903 = vadd.xlane.f32.xlu0 %v885
        %v904 = vpop.xlane.xlu0 %903
        %905 = vadd.xlane.f32.xlu0 %v886
        %v906 = vpop.xlane.xlu0 %905
        %907 = vadd.xlane.f32.xlu0 %v887
        %v908 = vpop.xlane.xlu0 %907
        %909 = vadd.xlane.f32.xlu0 %v888
        %v910 = vpop.xlane.xlu0 %909
        %911 = vadd.xlane.f32.xlu0 %v889
        %v912 = vpop.xlane.xlu0 %911
        %913 = vadd.xlane.f32.xlu0 %v890
        %v914 = vpop.xlane.xlu0 %913
        %915 = vadd.xlane.f32.xlu0 %v891
        %v916 = vpop.xlane.xlu0 %915
        %917 = vadd.xlane.f32.xlu0 %v892
        %v918 = vpop.xlane.xlu0 %917
        %919 = vadd.xlane.f32.xlu0 %v893
        %v920 = vpop.xlane.xlu0 %919
        %921 = vadd.xlane.f32.xlu0 %v894
        %v922 = vpop.xlane.xlu0 %921
        %923 = vadd.xlane.f32.xlu0 %v895
        %v924 = vpop.xlane.xlu0 %923
        %925 = vadd.xlane.f32.xlu0 %v896
        %v926 = vpop.xlane.xlu0 %925
        %927 = vadd.xlane.f32.xlu0 %v897
        %v928 = vpop.xlane.xlu0 %927
        %929 = vadd.xlane.f32.xlu0 %v898
        %v930 = vpop.xlane.xlu0 %929
        %v931 = vmax.f32 %v900, %v908
        %v932 = vmax.f32 %v902, %v910
        %v933 = vmax.f32 %v904, %v912
        %v934 = vmax.f32 %v906, %v914
        %v935 = vmax.f32 %v931, %v916
        %v936 = vmax.f32 %v932, %v918
        %v937 = vmax.f32 %v933, %v920
        %v938 = vmax.f32 %v934, %v922
        %v939 = vmax.f32 %v935, %v924
        %v940 = vmax.f32 %v936, %v926
        %v941 = vmax.f32 %v937, %v928
        %v942 = vmax.f32 %v938, %v930
        %v943 = vmax.f32 %v939, %v940
        %v944 = vmax.f32 %v941, %v942
        %v945 = vmax.f32 %v943, %v944
        %v946 = vrot.slane %v945, 4
        %v947 = vmax.f32 %v945, %v946
        %v948 = vrot.slane %v947, 2
        %v949 = vmax.f32 %v947, %v948
        %v950 = vrot.slane %v949, 1
        %v951 = vmax.f32 %v949, %v950
        %v952 = vsub.f32 %v900, %v951
        %v953 = vsub.f32 %v902, %v951
        %v954 = vsub.f32 %v904, %v951
        %v955 = vsub.f32 %v906, %v951
        %v956 = vsub.f32 %v908, %v951
        %v957 = vsub.f32 %v910, %v951
        %v958 = vsub.f32 %v912, %v951
        %v959 = vsub.f32 %v914, %v951
        %v960 = vsub.f32 %v916, %v951
        %v961 = vsub.f32 %v918, %v951
        %v962 = vsub.f32 %v920, %v951
        %v963 = vsub.f32 %v922, %v951
        %v964 = vsub.f32 %v924, %v951
        %v965 = vsub.f32 %v926, %v951
        %v966 = vsub.f32 %v928, %v951
        %v967 = vsub.f32 %v930, %v951
        %v968 = vmul.f32 %v952, 1.442695
        %v969 = vpow.pop %v968
        %v970 = vmul.f32 %v953, 1.442695
        %v971 = vpow.pop %v970
        %v972 = vmul.f32 %v954, 1.442695
        %v973 = vpow.pop %v972
        %v974 = vmul.f32 %v955, 1.442695
        %v975 = vpow.pop %v974
        %v976 = vmul.f32 %v956, 1.442695
        %v977 = vpow.pop %v976
        %v978 = vmul.f32 %v957, 1.442695
        %v979 = vpow.pop %v978
        %v980 = vmul.f32 %v958, 1.442695
        %v981 = vpow.pop %v980
        %v982 = vmul.f32 %v959, 1.442695
        %v983 = vpow.pop %v982
        %v984 = vmul.f32 %v960, 1.442695
        %v985 = vpow.pop %v984
        %v986 = vmul.f32 %v961, 1.442695
        %v987 = vpow.pop %v986
        %v988 = vmul.f32 %v962, 1.442695
        %v989 = vpow.pop %v988
        %v990 = vmul.f32 %v963, 1.442695
        %v991 = vpow.pop %v990
        %v992 = vmul.f32 %v964, 1.442695
        %v993 = vpow.pop %v992
        %v994 = vmul.f32 %v965, 1.442695
        %v995 = vpow.pop %v994
        %v996 = vmul.f32 %v966, 1.442695
        %v997 = vpow.pop %v996
        %v998 = vmul.f32 %v967, 1.442695
        %v999 = vpow.pop %v998
        %v1000 = vlaneseq
        %v1001 = vshrl.u32 %v1000, 7
        %v1002 = vlaneseq
        %v1003 = vand.u32 %v1002, 127
        %v1004 = vmul.u32 %v1001, 16
        %vm1005 = vcmp.ge.s32.totalorder %v1003, %v1004
        %v1006 = vadd.s32 %v1004, 16
        %vm1007 = vcmp.lt.s32.totalorder %v1003, %v1006
        %vm1008 = vmand %vm1005, %vm1007
        %v1009 = vsel %vm1008, 1, 0
        %v1010 = vcvt.s32.f32 %v1009
        %v1011 = vmul.f32 %v969, %v762
        %v1012 = vmul.f32 %v971, %v763
        %v1013 = vmul.f32 %v973, %v764
        %v1014 = vmul.f32 %v975, %v765
        %v1015 = vmul.f32 %v977, %v766
        %v1016 = vmul.f32 %v979, %v767
        %v1017 = vmul.f32 %v981, %v768
        %v1018 = vmul.f32 %v983, %v769
        %v1019 = vmul.f32 %v985, %v770
        %v1020 = vmul.f32 %v987, %v771
        %v1021 = vmul.f32 %v989, %v772
        %v1022 = vmul.f32 %v991, %v773
        %v1023 = vmul.f32 %v993, %v774
        %v1024 = vmul.f32 %v995, %v775
        %v1025 = vmul.f32 %v997, %v776
        %v1026 = vmul.f32 %v999, %v777
        %1027 = vmatpush.msra.mxu0 %v1026
        %1028 = vmatpush.msra.mxu0 %v1025
        %1029 = vmatpush.msra.mxu0 %v1024
        %1030 = vmatpush.msra.mxu0 %v1023
        %1031 = vmatpush.msra.mxu0 %v1022
        %1032 = vmatpush.msra.mxu0 %v1021
        %1033 = vmatpush.msra.mxu0 %v1020
        %1034 = vmatpush.msra.mxu0 %v1019
        %1035 = vmatpush.msra.mxu0 %v1018
        %1036 = vmatpush.msra.mxu0 %v1017
        %1037 = vmatpush.msra.mxu0 %v1016
        %1038 = vmatpush.msra.mxu0 %v1015
        %1039 = vmatpush.msra.mxu0 %v1014
        %1040 = vmatpush.msra.mxu0 %v1013
        %1041 = vmatpush.msra.mxu0 %v1012
        %1042 = vmatpush.msra.mxu0 %v1011
        %1043 = vmatmul.f32.gmra.mxu0 %v1010
        %v1044 = vpop.f32.mrf.mxu0
        %v1045 = vadd.f32 0.0, %v1044
        %1046 = vdwg.mxu0
        %1047 = vmatpush.msra.mxu0 %v999
        %1048 = vmatpush.msra.mxu0 %v997
        %1049 = vmatpush.msra.mxu0 %v995
        %1050 = vmatpush.msra.mxu0 %v993
        %1051 = vmatpush.msra.mxu0 %v991
        %1052 = vmatpush.msra.mxu0 %v989
        %1053 = vmatpush.msra.mxu0 %v987
        %1054 = vmatpush.msra.mxu0 %v985
        %1055 = vmatpush.msra.mxu0 %v983
        %1056 = vmatpush.msra.mxu0 %v981
        %1057 = vmatpush.msra.mxu0 %v979
        %1058 = vmatpush.msra.mxu0 %v977
        %1059 = vmatpush.msra.mxu0 %v975
        %1060 = vmatpush.msra.mxu0 %v973
        %1061 = vmatpush.msra.mxu0 %v971
        %1062 = vmatpush.msra.mxu0 %v969
        %1063 = vmatmul.f32.gmra.mxu0 %v1010
        %v1064 = vpop.f32.mrf.mxu0
        %v1065 = vadd.f32 0.0, %v1064
        %1066 = vdwg.mxu0
        %1068 = vset.pattern.permute.xlu0 0
        %1069 = vperm.xlu0 %1068, %v1065
        %v1070 = vpop.permute.xlu0 %1069
        %v1072 = vrcp.pop %v1070
        %v1073 = vmul.f32 %v1070, %v1072
        %v1074 = vsub.f32 1.0, %v1073
        %v1075 = vmul.f32 %v1072, %v1074
        %v1076 = vadd.f32 %v1072, %v1075
        %vm1077 = vweird.f32 %v1070
        %vm1078 = vweird.f32 %v1072
        %vm1079 = vmor %vm1077, %vm1078
        %v1080 = vsel %vm1079, %v1072, %v1076
        %v1081 = vand.u32 2147483647, %v1070
        %vm1082 = vcmp.eq.f32.partialorder %v1081, 8.507059e+37
        %v1083 = vand.u32 %v1070, 2147483648
        %v1084 = vor.u32 1.1754944e-38, %v1083
        %v1085 = vsel %vm1082, %v1084, %v1080
        %v1086 = vmul.f32 %v1045, %v1085
        %1087 = vst [vmem:[%s305] sm:$0xff] %v1086
        %s1088 = sand.u32 %s163, 1
        %s1089 = scalar_lea.sflag [#allocation4], %s1088
        %s1090 = sand.u32 %s163, 1
        %s1091 = smul.addr %s1090, 8
        %s1092 = scalar_lea.vmem [#allocation8], %s1091
        // Predicated region
        $region57: #{tpu_custom_call.1} parent=43 // pred_check
          %p1093 = pneg %p173
        $region58: #{tpu_custom_call.1} parent=43 // pred_check_branch
          %1095 = sbr.rel (%p1093) target = $region60
        $region59: #{tpu_custom_call.1} parent=43 // pred_region
          %1097 = vsyncadd %s1089, 0
          %s1098 = smul.addr %s24, 8
          %s1099 = scalar_lea.hbm %s6, %s1098
          %s1101 = sshll.u32 %s1092, 4
          %s1102 = int_to_ptr.vmem [resolvable:$true] %s1101
          %s1103 = sshll.u32 %s1099, 4
          %s1104 = int_to_ptr.hbm [resolvable:$true] %s1103
          %1106 = dma.vmem_to_hbm [thread:$0]  %s1102, 128, %s1104, %s1089
        $region60: #{tpu_custom_call.1} parent=43 // pred_fallthru
          _
      $region44: #{tpu_custom_call.1} parent=5 // pred_fallthru
        _
      %p1107 = scmp.le.s32.totalorder 2, %s19
      // Predicated region
      $region61: #{tpu_custom_call.1} parent=5 // pred_check
        %p1108 = pneg %p1107
      $region62: #{tpu_custom_call.1} parent=5 // pred_check_branch
        %1110 = sbr.rel (%p1108) target = $region64
      $region63: #{tpu_custom_call.1} parent=5 // pred_region
        %s1111 = ssub.s32 %s19, 2
        // Predicated region
        $region65: #{tpu_custom_call.1} parent=63 // pred_check
          %p1112 = pneg %p179
        $region66: #{tpu_custom_call.1} parent=63 // pred_check_branch
          %1114 = sbr.rel (%p1112) target = $region68
        $region67: #{tpu_custom_call.1} parent=63 // pred_region
          %s1115 = sand.u32 %s164, 1
          %s1116 = scalar_lea.sflag [#allocation4], %s1115
          %s1117 = sand.u32 %s164, 1
          %s1118 = smul.addr %s1117, 8
          %s1119 = scalar_lea.vmem [#allocation8], %s1118
          %1121 = dma.done %s1116, 128
        $region68: #{tpu_custom_call.1} parent=63 // pred_fallthru
          _
      $region64: #{tpu_custom_call.1} parent=5 // pred_fallthru
        _
    $region6: #{tpu_custom_call.1} parent=1 // loop_footer
      %s23 = sadd.s32 1, %s19
    $region7: #{tpu_custom_call.1} parent=1 // loop_footer_branch
      %18 = sbr.rel target = $region3
    $region8: #{tpu_custom_call.1} parent=1 // loop_exit
      _
    %1122 = vsyncpa [#allocation3], 1
    %s1123 = scalar_lea.sflag [#allocation3], 1
    %1124 = vsyncpa %s1123, 1
    %1125 = vsyncpa [#allocation6], 1
    %1126 = vsyncpa [#allocation4], 1
    %s1127 = scalar_lea.sflag [#allocation4], 1
    %1128 = vsyncpa %s1127, 1

</llo_original>
